<compile_context>
chip_gen: v6e
topology: v6e:2x2x1
jax: 0.10.0
libtpu: 0.0.40
codegen_flags: <defaults>
</compile_context>

<pallas_src>
import jax
import jax.numpy as jnp
from jax.experimental import pallas as pl
from jax.experimental.pallas import tpu as pltpu

LN_EPS = 1e-5  # config.layer_norm_eps (HF default)


def _gelu_exact(x):
    # erf-form GELU (matches torch.nn.functional.gelu default / HF `gelu`)
    return 0.5 * x * (1.0 + jax.lax.erf(x * (1.0 / jnp.sqrt(2.0))))


# ------------- Kernel 1: dense -> GELU -> LayerNorm -> Conv1d(k=1) -------------
def prologue_kernel(x_ref, wd_ref, bd_ref, gamma_ref, beta_ref,
                    wc_ref, bc_ref, z_ref):
    # x_ref: (S, H) f32 for one batch element; z_ref: (O, H) bf16 for same batch
    x = x_ref[...]
    # dense: Linear(H, H); bf16 operands, f32 accumulation on the MXU
    y = jnp.dot(x.astype(jnp.bfloat16), wd_ref[...],
                preferred_element_type=jnp.float32) + bd_ref[...]
    y = _gelu_exact(y)
    # layer norm over hidden dim (f32 math)
    mu = jnp.mean(y, axis=-1, keepdims=True)
    var = jnp.mean((y - mu) * (y - mu), axis=-1, keepdims=True)
    y = (y - mu) * jax.lax.rsqrt(var + LN_EPS)
    y = y * gamma_ref[...] + beta_ref[...]                       # (S, H)
    # conv1d(kernel_size=1): mixes the S ("channel") axis: (O, S) @ (S, H)
    z = jnp.dot(wc_ref[...].astype(jnp.bfloat16), y.astype(jnp.bfloat16),
                preferred_element_type=jnp.float32) + bc_ref[...]
    z_ref[...] = z.astype(z_ref.dtype)                           # bf16, once


# ------------- Kernel 2: decoder, streaming (H, V) in vocab tiles -------------
def decoder_kernel(z_ref, wdec_ref, bdec_ref, out_ref):
    # z is bf16 already (no per-tile cast); f32 accumulation on the MXU.
    out = jnp.dot(z_ref[...], wdec_ref[...],
                  preferred_element_type=jnp.float32) + bdec_ref[...]
    out_ref[...] = out.astype(out_ref.dtype)


def custom_roberta_lm_head(features, params, *, v_tile=2048, out_dtype=None,
                           vmem_limit_bytes=48 << 20):
    """features: (B, S, H) float32. Returns (B, conv_output_size, vocab_size)."""
    B, S, H = features.shape
    wd = params["wd"].astype(jnp.bfloat16)          # (H, H), pre-transposed
    bd = params["bd"]                               # (1, H)
    gamma, beta = params["gamma"], params["beta"]   # (1, H)
    wc = params["wc"]                               # (O, S)
    bc = params["bc"]                               # (O, 1)
    wdec = params["wdec"].astype(jnp.bfloat16)      # (H, V), pre-transposed
    bdec = params["bdec"]                           # (1, V)
    O = wc.shape[0]
    V = wdec.shape[1]
    out_dtype = features.dtype if out_dtype is None else out_dtype

    # ---------------- prologue: one grid step per batch element ----------------
    x2d = features.reshape(B * S, H)
    const2d = lambda a: pl.BlockSpec(a.shape, lambda b: (0, 0))  # grid-invariant
    z = pl.pallas_call(
        prologue_kernel,
        out_shape=jax.ShapeDtypeStruct((B * O, H), jnp.bfloat16),
        grid_spec=pltpu.PrefetchScalarGridSpec(
            num_scalar_prefetch=0,
            grid=(B,),
            in_specs=[
                pl.BlockSpec((S, H), lambda b: (b, 0)),          # this batch's rows
                const2d(wd), const2d(bd),                        # dense W^T (bf16), bias
                const2d(gamma), const2d(beta),                   # layer norm
                const2d(wc), const2d(bc),                        # conv1d (k=1)
            ],
            out_specs=pl.BlockSpec((O, H), lambda b: (b, 0)),
        ),
        compiler_params=pltpu.CompilerParams(dimension_semantics=("parallel",)),
    )(x2d, wd, bd, gamma, beta, wc, bc)

    # ---------------- decoder: stream (H, V) in lane-dense vocab tiles ----------------
    v_tile = min(v_tile, V)
    n_v = pl.cdiv(V, v_tile)
    Vp = n_v * v_tile
    if Vp != V:  # pad to a whole number of tiles (real vocab e.g. 50265)
        wdec = jnp.pad(wdec, ((0, 0), (0, Vp - V)))
        bdec = jnp.pad(bdec, ((0, 0), (0, Vp - V)))

    out2d = pl.pallas_call(
        decoder_kernel,
        out_shape=jax.ShapeDtypeStruct((B * O, Vp), out_dtype),
        grid_spec=pltpu.PrefetchScalarGridSpec(
            num_scalar_prefetch=0,
            grid=(n_v,),
            in_specs=[
                pl.BlockSpec((B * O, H), lambda v: (0, 0)),      # z (bf16, tiny, invariant)
                pl.BlockSpec((H, v_tile), lambda v: (0, v)),     # decoder W^T tile (bf16)
                pl.BlockSpec((1, v_tile), lambda v: (0, v)),     # decoder bias tile
            ],
            out_specs=pl.BlockSpec((B * O, v_tile), lambda v: (0, v)),
        ),
        compiler_params=pltpu.CompilerParams(
            # No cross-tile carry anymore -> vocab axis is parallel (v7x megacore).
            dimension_semantics=("parallel",),
            vmem_limit_bytes=vmem_limit_bytes,
        ),
    )(z, wdec, bdec)

    if Vp != V:
        out2d = out2d[:, :V]
    return out2d.reshape(B, O, V)


def reference(features, params):
    wd = params["wd"].astype(jnp.float32)
    wdec = params["wdec"].astype(jnp.float32)
    x = features @ wd + params["bd"]
    x = _gelu_exact(x)
    mu = jnp.mean(x, axis=-1, keepdims=True)
    var = jnp.mean((x - mu) ** 2, axis=-1, keepdims=True)
    x = (x - mu) / jnp.sqrt(var + LN_EPS) * params["gamma"] + params["beta"]
    x = jnp.einsum("os,bsh->boh", params["wc"], x) + params["bc"][None]
    x = x @ wdec + params["bdec"]
    return x


def make_params(key, hidden, conv_in, conv_out, vocab):
    ks = jax.random.split(key, 6)
    scale = 0.02
    return {
        # dense: stored transposed so the kernel does x @ wd; bf16 master weight
        "wd": (scale * jax.random.normal(ks[0], (hidden, hidden), jnp.float32)
               ).astype(jnp.bfloat16),
        "bd": scale * jax.random.normal(ks[1], (1, hidden), jnp.float32),
        "gamma": jnp.ones((1, hidden), jnp.float32),
        "beta": jnp.zeros((1, hidden), jnp.float32),
        # conv1d kernel_size=1 weight: (out_channels, in_channels)
        "wc": scale * jax.random.normal(ks[2], (conv_out, conv_in), jnp.float32),
        "bc": scale * jax.random.normal(ks[3], (conv_out, 1), jnp.float32),
        # decoder: stored transposed (hidden, vocab); bf16 master weight
        "wdec": (scale * jax.random.normal(ks[4], (hidden, vocab), jnp.float32)
                 ).astype(jnp.bfloat16),
        "bdec": jnp.zeros((1, vocab), jnp.float32),  # self.bias = zeros(vocab)
    }


if __name__ == "__main__":
    B, S, H = 2, 8, 64          # conv_input_size == seq_len == 8
    CONV_OUT, V = 8, 512        # conv_output_size, vocab_size

    key = jax.random.PRNGKey(0)
    kf, kp = jax.random.split(key)
    features = jax.random.normal(kf, (B, S, H), jnp.float32)
    params = make_params(kp, H, S, CONV_OUT, V)

    out = custom_roberta_lm_head(features, params, v_tile=256)  # 2 vocab tiles
    out = jax.block_until_ready(out)

    ref = reference(features, params)
    assert out.shape == (B, CONV_OUT, V)
    # bf16 weights / bf16 matmul operands and bf16 z -> looser tolerance than f32.
    assert jnp.allclose(out, ref, atol=3e-3, rtol=2e-2)
    print("KERNEL_OK")
</pallas_src>

<mosaic_0001>
module attributes {stable_mosaic.version = 11 : i64} {
  func.func @prologue_kernel(%arg0: i32, %arg1: memref<8x64xf32, #tpu.memory_space<vmem>>, %arg2: memref<64x64xbf16, #tpu.memory_space<vmem>>, %arg3: memref<1x64xf32, #tpu.memory_space<vmem>>, %arg4: memref<1x64xf32, #tpu.memory_space<vmem>>, %arg5: memref<1x64xf32, #tpu.memory_space<vmem>>, %arg6: memref<8x8xf32, #tpu.memory_space<vmem>>, %arg7: memref<8x1xf32, #tpu.memory_space<vmem>>, %arg8: memref<8x64xbf16, #tpu.memory_space<vmem>>) attributes {dimension_semantics = [#tpu.dimension_semantics<parallel>], iteration_bounds = array<i64: 2>, scalar_prefetch = 0 : i64, scratch_operands = 0 : i64, tpu.core_type = #tpu.core_type<tc>, window_params = [{transform_indices = @transform_0, window_bounds = array<i64: 8, 64>}, {pipeline_mode = #tpu.pipeline_mode<synchronous>, transform_indices = @transform_1, window_bounds = array<i64: 64, 64>}, {pipeline_mode = #tpu.pipeline_mode<synchronous>, transform_indices = @transform_2, window_bounds = array<i64: 1, 64>}, {pipeline_mode = #tpu.pipeline_mode<synchronous>, transform_indices = @transform_3, window_bounds = array<i64: 1, 64>}, {pipeline_mode = #tpu.pipeline_mode<synchronous>, transform_indices = @transform_4, window_bounds = array<i64: 1, 64>}, {pipeline_mode = #tpu.pipeline_mode<synchronous>, transform_indices = @transform_5, window_bounds = array<i64: 8, 8>}, {pipeline_mode = #tpu.pipeline_mode<synchronous>, transform_indices = @transform_6, window_bounds = array<i64: 8, 1>}, {transform_indices = @transform_7, window_bounds = array<i64: 8, 64>}]} {
    %c0 = arith.constant 0 : index
    %c0_0 = arith.constant 0 : index
    %0 = vector.load %arg1[%c0, %c0_0] : memref<8x64xf32, #tpu.memory_space<vmem>>, vector<8x64xf32>
    %1 = arith.truncf %0 : vector<8x64xf32> to vector<8x64xbf16>
    %c0_1 = arith.constant 0 : index
    %c0_2 = arith.constant 0 : index
    %2 = vector.load %arg2[%c0_1, %c0_2] : memref<64x64xbf16, #tpu.memory_space<vmem>>, vector<64x64xbf16>
    %cst = arith.constant dense<0.000000e+00> : vector<8x64xf32>
    %3 = tpu.matmul %1, %2, %cst {dimension_numbers = #tpu.dot_dimension_numbers<[1], [0], [0], [1], [0, 0, 1, 1], [], []>} : vector<8x64xbf16>, vector<64x64xbf16>, vector<8x64xf32> -> vector<8x64xf32>
    %c0_3 = arith.constant 0 : index
    %c0_4 = arith.constant 0 : index
    %4 = vector.load %arg3[%c0_3, %c0_4] : memref<1x64xf32, #tpu.memory_space<vmem>>, vector<1x64xf32>
    %5 = vector.broadcast %4 : vector<1x64xf32> to vector<8x64xf32>
    %6 = arith.addf %3, %5 : vector<8x64xf32>
    %cst_5 = arith.constant 5.000000e-01 : f32
    %7 = vector.broadcast %cst_5 : f32 to vector<8x64xf32>
    %8 = arith.mulf %7, %6 : vector<8x64xf32>
    %cst_6 = arith.constant 2.000000e+00 : f32
    %9 = math.sqrt %cst_6 : f32
    %cst_7 = arith.constant 1.000000e+00 : f32
    %10 = arith.divf %cst_7, %9 : f32
    %11 = vector.broadcast %10 : f32 to vector<8x64xf32>
    %12 = arith.mulf %6, %11 : vector<8x64xf32>
    %13 = math.erf %12 : vector<8x64xf32>
    %cst_8 = arith.constant 1.000000e+00 : f32
    %14 = vector.broadcast %cst_8 : f32 to vector<8x64xf32>
    %15 = arith.addf %14, %13 : vector<8x64xf32>
    %16 = arith.mulf %8, %15 : vector<8x64xf32>
    %cst_9 = arith.constant dense<0.000000e+00> : vector<8xf32>
    %17 = vector.multi_reduction <add>, %16, %cst_9 [1] : vector<8x64xf32> to vector<8xf32>
    %18 = vector.shape_cast %17 : vector<8xf32> to vector<8x1xf32>
    %cst_10 = arith.constant 6.400000e+01 : f32
    %19 = vector.broadcast %cst_10 : f32 to vector<8x1xf32>
    %20 = arith.divf %18, %19 : vector<8x1xf32>
    %21 = vector.broadcast %20 : vector<8x1xf32> to vector<8x64xf32>
    %22 = arith.subf %16, %21 : vector<8x64xf32>
    %23 = vector.broadcast %20 : vector<8x1xf32> to vector<8x64xf32>
    %24 = arith.subf %16, %23 : vector<8x64xf32>
    %25 = arith.mulf %22, %24 : vector<8x64xf32>
    %cst_11 = arith.constant dense<0.000000e+00> : vector<8xf32>
    %26 = vector.multi_reduction <add>, %25, %cst_11 [1] : vector<8x64xf32> to vector<8xf32>
    %27 = vector.shape_cast %26 : vector<8xf32> to vector<8x1xf32>
    %cst_12 = arith.constant 6.400000e+01 : f32
    %28 = vector.broadcast %cst_12 : f32 to vector<8x1xf32>
    %29 = arith.divf %27, %28 : vector<8x1xf32>
    %30 = vector.broadcast %20 : vector<8x1xf32> to vector<8x64xf32>
    %31 = arith.subf %16, %30 : vector<8x64xf32>
    %cst_13 = arith.constant 9.99999974E-6 : f32
    %32 = vector.broadcast %cst_13 : f32 to vector<8x1xf32>
    %33 = arith.addf %29, %32 : vector<8x1xf32>
    %34 = math.rsqrt %33 : vector<8x1xf32>
    %35 = vector.broadcast %34 : vector<8x1xf32> to vector<8x64xf32>
    %36 = arith.mulf %31, %35 : vector<8x64xf32>
    %c0_14 = arith.constant 0 : index
    %c0_15 = arith.constant 0 : index
    %37 = vector.load %arg4[%c0_14, %c0_15] : memref<1x64xf32, #tpu.memory_space<vmem>>, vector<1x64xf32>
    %38 = vector.broadcast %37 : vector<1x64xf32> to vector<8x64xf32>
    %39 = arith.mulf %36, %38 : vector<8x64xf32>
    %c0_16 = arith.constant 0 : index
    %c0_17 = arith.constant 0 : index
    %40 = vector.load %arg5[%c0_16, %c0_17] : memref<1x64xf32, #tpu.memory_space<vmem>>, vector<1x64xf32>
    %41 = vector.broadcast %40 : vector<1x64xf32> to vector<8x64xf32>
    %42 = arith.addf %39, %41 : vector<8x64xf32>
    %c0_18 = arith.constant 0 : index
    %c0_19 = arith.constant 0 : index
    %43 = vector.load %arg6[%c0_18, %c0_19] : memref<8x8xf32, #tpu.memory_space<vmem>>, vector<8x8xf32>
    %44 = arith.truncf %43 : vector<8x8xf32> to vector<8x8xbf16>
    %45 = arith.truncf %42 : vector<8x64xf32> to vector<8x64xbf16>
    %cst_20 = arith.constant dense<0.000000e+00> : vector<8x64xf32>
    %46 = tpu.matmul %44, %45, %cst_20 {dimension_numbers = #tpu.dot_dimension_numbers<[1], [0], [0], [1], [0, 0, 1, 1], [], []>} : vector<8x8xbf16>, vector<8x64xbf16>, vector<8x64xf32> -> vector<8x64xf32>
    %c0_21 = arith.constant 0 : index
    %c0_22 = arith.constant 0 : index
    %47 = vector.load %arg7[%c0_21, %c0_22] : memref<8x1xf32, #tpu.memory_space<vmem>>, vector<8x1xf32>
    %48 = vector.broadcast %47 : vector<8x1xf32> to vector<8x64xf32>
    %49 = arith.addf %46, %48 : vector<8x64xf32>
    %50 = arith.truncf %49 : vector<8x64xf32> to vector<8x64xbf16>
    %c0_23 = arith.constant 0 : index
    %c0_24 = arith.constant 0 : index
    %51 = vector.load %arg8[%c0_23, %c0_24] : memref<8x64xbf16, #tpu.memory_space<vmem>>, vector<8x64xbf16>
    tpu.vector_store %arg8[%c0_23, %c0_24], %50 {strides = array<i32>} : memref<8x64xbf16, #tpu.memory_space<vmem>>, vector<8x64xbf16>,
    return
  }
  func.func @transform_0(%arg0: i32) -> (i32, i32) {
    %c0_i32 = arith.constant 0 : i32
    %c0_i32_0 = arith.constant 0 : i32
    return %arg0, %c0_i32 : i32, i32
  }
  func.func @transform_1(%arg0: i32) -> (i32, i32) {
    %c0_i32 = arith.constant 0 : i32
    %c0_i32_0 = arith.constant 0 : i32
    %c0_i32_1 = arith.constant 0 : i32
    return %c0_i32, %c0_i32_0 : i32, i32
  }
  func.func @transform_2(%arg0: i32) -> (i32, i32) {
    %c0_i32 = arith.constant 0 : i32
    %c0_i32_0 = arith.constant 0 : i32
    %c0_i32_1 = arith.constant 0 : i32
    return %c0_i32, %c0_i32_0 : i32, i32
  }
  func.func @transform_3(%arg0: i32) -> (i32, i32) {
    %c0_i32 = arith.constant 0 : i32
    %c0_i32_0 = arith.constant 0 : i32
    %c0_i32_1 = arith.constant 0 : i32
    return %c0_i32, %c0_i32_0 : i32, i32
  }
  func.func @transform_4(%arg0: i32) -> (i32, i32) {
    %c0_i32 = arith.constant 0 : i32
    %c0_i32_0 = arith.constant 0 : i32
    %c0_i32_1 = arith.constant 0 : i32
    return %c0_i32, %c0_i32_0 : i32, i32
  }
  func.func @transform_5(%arg0: i32) -> (i32, i32) {
    %c0_i32 = arith.constant 0 : i32
    %c0_i32_0 = arith.constant 0 : i32
    %c0_i32_1 = arith.constant 0 : i32
    return %c0_i32, %c0_i32_0 : i32, i32
  }
  func.func @transform_6(%arg0: i32) -> (i32, i32) {
    %c0_i32 = arith.constant 0 : i32
    %c0_i32_0 = arith.constant 0 : i32
    %c0_i32_1 = arith.constant 0 : i32
    return %c0_i32, %c0_i32_0 : i32, i32
  }
  func.func @transform_7(%arg0: i32) -> (i32, i32) {
    %c0_i32 = arith.constant 0 : i32
    %c0_i32_0 = arith.constant 0 : i32
    return %arg0, %c0_i32 : i32, i32
  }
}

</mosaic_0001>

<llo_original>
// kernel: tpu_custom_call.1
$region0: #{tpu_custom_call.1}
  #allocation0 [shape = 'u32[]', space=smem, size = 0x4, offset = 0x4, fixed_abs, tag = 'smem constant byte address 0x4 - core index']
  #allocation1 [shape = 'u32[144,128]{1,0:T(1,128)}', space=vmem, size = 0x12000, scoped, tag = 'internal scratch']
  %s0 = inlined_call_operand.hbm [shape: f32[16,64], index: 0, kind: input, shape index: {}]
  %s1 = inlined_call_operand.hbm [shape: bf16[64,64], index: 1, kind: input, shape index: {}]
  %s2 = inlined_call_operand.vmem [shape: f32[1,64], index: 2, kind: input, shape index: {}]
  %s3 = inlined_call_operand.vmem [shape: f32[1,64], index: 3, kind: input, shape index: {}]
  %s4 = inlined_call_operand.vmem [shape: f32[1,64], index: 4, kind: input, shape index: {}]
  %s5 = inlined_call_operand.vmem [shape: f32[8,8], index: 5, kind: input, shape index: {}]
  %s6 = inlined_call_operand.vmem [shape: f32[8,1], index: 6, kind: input, shape index: {}]
  %s7 = inlined_call_operand.hbm [shape: bf16[16,64], index: 7, kind: output, shape index: {}]
  %s8 = sld [smem:[#allocation0]]
  $region69: #{tpu_custom_call.1} parent=0
    _
  %s10 = ssub.s32 1, %s8
  %s11 = scalar_select 0, %s10, %s8
  $region1: #{tpu_custom_call.1} parent=0
    #allocation2 [shape = 'u8[8192]{0}', space=vmem, size = 0x2000, scoped, tag = 'input window, operand 0']
    #allocation3 [shape = 's32[2]{0}', space=sflag, size = 0x8, scoped, tag = 'scoped memory for tpu_custom_call.1']
    #allocation4 [shape = 's32[2]{0}', space=sflag, size = 0x8, scoped, tag = 'scoped memory for tpu_custom_call.1']
    #allocation5 [shape = 'u8[16384]{0}', space=vmem, size = 0x4000, scoped, tag = 'input window, operand 1, single buffered']
    #allocation6 [shape = 's32[1]{0}', space=sflag, size = 0x4, scoped, tag = 'scoped memory for tpu_custom_call.1']
    #allocation7 [shape = 'u8[4096]{0}', space=vmem, size = 0x1000, scoped, tag = 'output window, operand 0']
    %12 = vsyncpa [#allocation3], 0
    %s13 = scalar_lea.sflag [#allocation3], 1
    %14 = vsyncpa %s13, 0
    %15 = vsyncpa [#allocation6], 0
    %16 = vsyncpa [#allocation4], 0
    %s17 = scalar_lea.sflag [#allocation4], 1
    %18 = vsyncpa %s17, 0
    loop: start=0, step=1, limit=4
    $region2: #{tpu_custom_call.1} parent=1 // loop_pre_header
      _
    $region3: #{tpu_custom_call.1} parent=1 // loop_header
      %s20 = sphi 0, %s24
      %p21 = scmp.ge.s32.totalorder %s20, 4
      %s30 = sphi 0, %s32
      %s33 = sphi 0, %s30
      %s34 = sphi 0, %s33
      %s50 = sphi 0, %s34
      %s54 = sphi 0, %s54
      %s56 = sphi 0, %s54
      %s57 = sphi 0, %s56
      %s71 = sphi 0, %s57
      %s75 = sphi 0, %s75
      %s77 = sphi 0, %s75
      %s78 = sphi 0, %s77
      %s92 = sphi 0, %s78
      %s96 = sphi 0, %s96
      %s98 = sphi 0, %s96
      %s99 = sphi 0, %s98
      %s113 = sphi 0, %s99
      %s117 = sphi 0, %s117
      %s119 = sphi 0, %s117
      %s120 = sphi 0, %s119
      %s134 = sphi 0, %s120
      %s138 = sphi 0, %s138
      %s140 = sphi 0, %s138
      %s141 = sphi 0, %s140
      %s155 = sphi 0, %s141
      %s159 = sphi 0, %s159
      %s161 = sphi 0, %s159
      %s162 = sphi 0, %s161
      %s176 = sphi 0, %s162
      %s182 = sphi 0, %s184
      %s185 = sphi 0, %s182
      %s186 = sphi 0, %s185
      %s202 = sphi 0, %s186
    $region4: #{tpu_custom_call.1} parent=1 // loop_header_branch
      %23 = sbr.rel (%p21) target = $region8
    $region5: #{tpu_custom_call.1} parent=1 // loop_body
      %s25 = ssub.s32 %s20, 1
      %s26 = ssub.s32 %s20, 2
      %s27 = sadd.s32 %s20, 1
      %s28 = ssub.s32 %s20, %s27
      %p29 = scmp.eq.s32.totalorder %s28, 0
      %s31 = sadd.s32 %s30, 1
      %s32 = scalar_select %p29, %s30, %s31
      %p35 = pneg %p29
      %p36 = scmp.eq.s32.totalorder %s20, 1
      %p37 = por %p35, %p36
      %p38 = scmp.ne.s32.totalorder %s30, %s33
      %p39 = scmp.eq.s32.totalorder %s20, 0
      %p40 = por %p38, %p39
      %p41 = scmp.ne.s32.totalorder %s30, %s33
      %p42 = scmp.eq.s32.totalorder %s25, 1
      %p43 = por %p41, %p42
      %p44 = scmp.ne.s32.totalorder %s33, %s34
      %p45 = scmp.eq.s32.totalorder %s25, 0
      %p46 = por %p44, %p45
      %p47 = scmp.ne.s32.totalorder %s33, %s34
      %p48 = scmp.eq.s32.totalorder %s26, 1
      %p49 = por %p47, %p48
      %p51 = scmp.ne.s32.totalorder %s34, %s50
      %p52 = scmp.eq.s32.totalorder %s26, 0
      %p53 = por %p51, %p52
      %s55 = sadd.s32 %s54, 1
      %p58 = scmp.eq.s32.totalorder %s20, 1
      %p59 = scmp.ne.s32.totalorder %s54, %s56
      %p60 = scmp.eq.s32.totalorder %s20, 0
      %p61 = por %p59, %p60
      %p62 = scmp.ne.s32.totalorder %s54, %s56
      %p63 = scmp.eq.s32.totalorder %s25, 1
      %p64 = por %p62, %p63
      %p65 = scmp.ne.s32.totalorder %s56, %s57
      %p66 = scmp.eq.s32.totalorder %s25, 0
      %p67 = por %p65, %p66
      %p68 = scmp.ne.s32.totalorder %s56, %s57
      %p69 = scmp.eq.s32.totalorder %s26, 1
      %p70 = por %p68, %p69
      %p72 = scmp.ne.s32.totalorder %s57, %s71
      %p73 = scmp.eq.s32.totalorder %s26, 0
      %p74 = por %p72, %p73
      %s76 = sadd.s32 %s75, 1
      %p79 = scmp.eq.s32.totalorder %s20, 1
      %p80 = scmp.ne.s32.totalorder %s75, %s77
      %p81 = scmp.eq.s32.totalorder %s20, 0
      %p82 = por %p80, %p81
      %p83 = scmp.ne.s32.totalorder %s75, %s77
      %p84 = scmp.eq.s32.totalorder %s25, 1
      %p85 = por %p83, %p84
      %p86 = scmp.ne.s32.totalorder %s77, %s78
      %p87 = scmp.eq.s32.totalorder %s25, 0
      %p88 = por %p86, %p87
      %p89 = scmp.ne.s32.totalorder %s77, %s78
      %p90 = scmp.eq.s32.totalorder %s26, 1
      %p91 = por %p89, %p90
      %p93 = scmp.ne.s32.totalorder %s78, %s92
      %p94 = scmp.eq.s32.totalorder %s26, 0
      %p95 = por %p93, %p94
      %s97 = sadd.s32 %s96, 1
      %p100 = scmp.eq.s32.totalorder %s20, 1
      %p101 = scmp.ne.s32.totalorder %s96, %s98
      %p102 = scmp.eq.s32.totalorder %s20, 0
      %p103 = por %p101, %p102
      %p104 = scmp.ne.s32.totalorder %s96, %s98
      %p105 = scmp.eq.s32.totalorder %s25, 1
      %p106 = por %p104, %p105
      %p107 = scmp.ne.s32.totalorder %s98, %s99
      %p108 = scmp.eq.s32.totalorder %s25, 0
      %p109 = por %p107, %p108
      %p110 = scmp.ne.s32.totalorder %s98, %s99
      %p111 = scmp.eq.s32.totalorder %s26, 1
      %p112 = por %p110, %p111
      %p114 = scmp.ne.s32.totalorder %s99, %s113
      %p115 = scmp.eq.s32.totalorder %s26, 0
      %p116 = por %p114, %p115
      %s118 = sadd.s32 %s117, 1
      %p121 = scmp.eq.s32.totalorder %s20, 1
      %p122 = scmp.ne.s32.totalorder %s117, %s119
      %p123 = scmp.eq.s32.totalorder %s20, 0
      %p124 = por %p122, %p123
      %p125 = scmp.ne.s32.totalorder %s117, %s119
      %p126 = scmp.eq.s32.totalorder %s25, 1
      %p127 = por %p125, %p126
      %p128 = scmp.ne.s32.totalorder %s119, %s120
      %p129 = scmp.eq.s32.totalorder %s25, 0
      %p130 = por %p128, %p129
      %p131 = scmp.ne.s32.totalorder %s119, %s120
      %p132 = scmp.eq.s32.totalorder %s26, 1
      %p133 = por %p131, %p132
      %p135 = scmp.ne.s32.totalorder %s120, %s134
      %p136 = scmp.eq.s32.totalorder %s26, 0
      %p137 = por %p135, %p136
      %s139 = sadd.s32 %s138, 1
      %p142 = scmp.eq.s32.totalorder %s20, 1
      %p143 = scmp.ne.s32.totalorder %s138, %s140
      %p144 = scmp.eq.s32.totalorder %s20, 0
      %p145 = por %p143, %p144
      %p146 = scmp.ne.s32.totalorder %s138, %s140
      %p147 = scmp.eq.s32.totalorder %s25, 1
      %p148 = por %p146, %p147
      %p149 = scmp.ne.s32.totalorder %s140, %s141
      %p150 = scmp.eq.s32.totalorder %s25, 0
      %p151 = por %p149, %p150
      %p152 = scmp.ne.s32.totalorder %s140, %s141
      %p153 = scmp.eq.s32.totalorder %s26, 1
      %p154 = por %p152, %p153
      %p156 = scmp.ne.s32.totalorder %s141, %s155
      %p157 = scmp.eq.s32.totalorder %s26, 0
      %p158 = por %p156, %p157
      %s160 = sadd.s32 %s159, 1
      %p163 = scmp.eq.s32.totalorder %s20, 1
      %p164 = scmp.ne.s32.totalorder %s159, %s161
      %p165 = scmp.eq.s32.totalorder %s20, 0
      %p166 = por %p164, %p165
      %p167 = scmp.ne.s32.totalorder %s159, %s161
      %p168 = scmp.eq.s32.totalorder %s25, 1
      %p169 = por %p167, %p168
      %p170 = scmp.ne.s32.totalorder %s161, %s162
      %p171 = scmp.eq.s32.totalorder %s25, 0
      %p172 = por %p170, %p171
      %p173 = scmp.ne.s32.totalorder %s161, %s162
      %p174 = scmp.eq.s32.totalorder %s26, 1
      %p175 = por %p173, %p174
      %p177 = scmp.ne.s32.totalorder %s162, %s176
      %p178 = scmp.eq.s32.totalorder %s26, 0
      %p179 = por %p177, %p178
      %s180 = ssub.s32 %s20, %s27
      %p181 = scmp.eq.s32.totalorder %s180, 0
      %s183 = sadd.s32 %s182, 1
      %s184 = scalar_select %p181, %s182, %s183
      %p187 = pneg %p181
      %p188 = scmp.eq.s32.totalorder %s20, 1
      %p189 = por %p187, %p188
      %p190 = scmp.ne.s32.totalorder %s182, %s185
      %p191 = scmp.eq.s32.totalorder %s20, 0
      %p192 = por %p190, %p191
      %p193 = scmp.ne.s32.totalorder %s182, %s185
      %p194 = scmp.eq.s32.totalorder %s25, 1
      %p195 = por %p193, %p194
      %p196 = scmp.ne.s32.totalorder %s185, %s186
      %p197 = scmp.eq.s32.totalorder %s25, 0
      %p198 = por %p196, %p197
      %p199 = scmp.ne.s32.totalorder %s185, %s186
      %p200 = scmp.eq.s32.totalorder %s26, 1
      %p201 = por %p199, %p200
      %p203 = scmp.ne.s32.totalorder %s186, %s202
      %p204 = scmp.eq.s32.totalorder %s26, 0
      %p205 = por %p203, %p204
      %p206 = scmp.le.s32.totalorder 1, %s20
      %p207 = scmp.lt.s32.totalorder %s20, 3
      %p208 = pnand %p206, %p207
      %p209 = pneg %p208
      // Predicated region
      $region9: #{tpu_custom_call.1} parent=5 // pred_check
        _
      $region10: #{tpu_custom_call.1} parent=5 // pred_check_branch
        %211 = sbr.rel (%p208) target = $region12
      $region11: #{tpu_custom_call.1} parent=5 // pred_region
        %s212 = ssub.s32 %s20, 1
        // Predicated region
        $region13: #{tpu_custom_call.1} parent=11 // pred_check
          %p213 = pneg %p67
        $region14: #{tpu_custom_call.1} parent=11 // pred_check_branch
          %215 = sbr.rel (%p213) target = $region16
        $region15: #{tpu_custom_call.1} parent=11 // pred_region
          %s217 = ssub.s32 512, 512
          %218 = vsyncadd [#allocation6], %s217
          %s219 = sshll.u32 [#allocation5], 4
          %s220 = int_to_ptr.vmem [resolvable:$true] %s219
          %225 = dma.hbm_to_vmem [thread:$0]  %s1, 512, %s220, [#allocation6], 64, 64, 4
        $region16: #{tpu_custom_call.1} parent=11 // pred_fallthru
          _
        // Predicated region
        $region17: #{tpu_custom_call.1} parent=11 // pred_check
          %p226 = pneg %p88
        $region18: #{tpu_custom_call.1} parent=11 // pred_check_branch
          %228 = sbr.rel (%p226) target = $region20
        $region19: #{tpu_custom_call.1} parent=11 // pred_region
          _
        $region20: #{tpu_custom_call.1} parent=11 // pred_fallthru
          _
        // Predicated region
        $region21: #{tpu_custom_call.1} parent=11 // pred_check
          %p229 = pneg %p109
        $region22: #{tpu_custom_call.1} parent=11 // pred_check_branch
          %231 = sbr.rel (%p229) target = $region24
        $region23: #{tpu_custom_call.1} parent=11 // pred_region
          _
        $region24: #{tpu_custom_call.1} parent=11 // pred_fallthru
          _
        // Predicated region
        $region25: #{tpu_custom_call.1} parent=11 // pred_check
          %p232 = pneg %p130
        $region26: #{tpu_custom_call.1} parent=11 // pred_check_branch
          %234 = sbr.rel (%p232) target = $region28
        $region27: #{tpu_custom_call.1} parent=11 // pred_region
          _
        $region28: #{tpu_custom_call.1} parent=11 // pred_fallthru
          _
        // Predicated region
        $region29: #{tpu_custom_call.1} parent=11 // pred_check
          %p235 = pneg %p151
        $region30: #{tpu_custom_call.1} parent=11 // pred_check_branch
          %237 = sbr.rel (%p235) target = $region32
        $region31: #{tpu_custom_call.1} parent=11 // pred_region
          _
        $region32: #{tpu_custom_call.1} parent=11 // pred_fallthru
          _
        // Predicated region
        $region33: #{tpu_custom_call.1} parent=11 // pred_check
          %p238 = pneg %p172
        $region34: #{tpu_custom_call.1} parent=11 // pred_check_branch
          %240 = sbr.rel (%p238) target = $region36
        $region35: #{tpu_custom_call.1} parent=11 // pred_region
          _
        $region36: #{tpu_custom_call.1} parent=11 // pred_fallthru
          _
      $region12: #{tpu_custom_call.1} parent=5 // pred_fallthru
        _
      %p241 = scmp.lt.s32.totalorder %s20, 2
      // Predicated region
      $region37: #{tpu_custom_call.1} parent=5 // pred_check
        %p242 = pneg %p241
      $region38: #{tpu_custom_call.1} parent=5 // pred_check_branch
        %244 = sbr.rel (%p242) target = $region40
      $region39: #{tpu_custom_call.1} parent=5 // pred_region
        // Predicated region
        $region41: #{tpu_custom_call.1} parent=39 // pred_check
          %p245 = pneg %p40
        $region42: #{tpu_custom_call.1} parent=39 // pred_check_branch
          %247 = sbr.rel (%p245) target = $region44
        $region43: #{tpu_custom_call.1} parent=39 // pred_region
          %s248 = sand.u32 %s30, 1
          %s249 = scalar_lea.sflag [#allocation3], %s248
          %s250 = sand.u32 %s30, 1
          %s251 = smul.addr %s250, 8
          %s252 = scalar_lea.vmem [#allocation2], %s251
          %s254 = ssub.s32 128, 128
          %255 = vsyncadd %s249, %s254
          %s256 = smul.addr %s20, 128
          %s257 = scalar_lea.hbm %s0, %s256
          %s259 = sshll.u32 %s252, 4
          %s260 = int_to_ptr.vmem [resolvable:$true] %s259
          %262 = dma.hbm_to_vmem [thread:$0]  %s257, 128, %s260, %s249
        $region44: #{tpu_custom_call.1} parent=39 // pred_fallthru
          _
      $region40: #{tpu_custom_call.1} parent=5 // pred_fallthru
        _
      %p263 = scmp.le.s32.totalorder 1, %s20
      %p264 = scmp.lt.s32.totalorder %s20, 3
      %p265 = pnand %p263, %p264
      %p266 = pneg %p265
      // Predicated region
      $region45: #{tpu_custom_call.1} parent=5 // pred_check
        _
      $region46: #{tpu_custom_call.1} parent=5 // pred_check_branch
        %268 = sbr.rel (%p265) target = $region48
      $region47: #{tpu_custom_call.1} parent=5 // pred_region
        %s269 = ssub.s32 %s20, 1
        %s270 = sand.u32 %s33, 1
        %s271 = scalar_lea.sflag [#allocation3], %s270
        %s272 = sand.u32 %s33, 1
        %s273 = smul.addr %s272, 8
        %s274 = scalar_lea.vmem [#allocation2], %s273
        // Predicated region
        $region49: #{tpu_custom_call.1} parent=47 // pred_check
          %p275 = pneg %p46
        $region50: #{tpu_custom_call.1} parent=47 // pred_check_branch
          %277 = sbr.rel (%p275) target = $region52
        $region51: #{tpu_custom_call.1} parent=47 // pred_region
          %278 = dma.done %s271, 128
        $region52: #{tpu_custom_call.1} parent=47 // pred_fallthru
          _
        // Predicated region
        $region53: #{tpu_custom_call.1} parent=47 // pred_check
          %p279 = pneg %p67
        $region54: #{tpu_custom_call.1} parent=47 // pred_check_branch
          %281 = sbr.rel (%p279) target = $region56
        $region55: #{tpu_custom_call.1} parent=47 // pred_region
          %282 = dma.done [#allocation6], 512
        $region56: #{tpu_custom_call.1} parent=47 // pred_fallthru
          _
        %s283 = sand.u32 %s33, 1
        %s284 = scalar_lea.sflag [#allocation3], %s283
        %s285 = sand.u32 %s33, 1
        %s286 = smul.addr %s285, 8
        %s287 = scalar_lea.vmem [#allocation2], %s286
        %p288 = pneg %p46
        %p289 = pneg %p43
        %p290 = pneg %p67
        %p291 = pneg %p64
        %p292 = pneg %p88
        %p293 = pneg %p85
        %p294 = pneg %p109
        %p295 = pneg %p106
        %p296 = pneg %p130
        %p297 = pneg %p127
        %p298 = pneg %p151
        %p299 = pneg %p148
        %p300 = pneg %p172
        %p301 = pneg %p169
        %p302 = pneg %p198
        %p303 = pneg %p195
        %s304 = sand.u32 %s185, 1
        %s305 = scalar_lea.sflag [#allocation4], %s304
        %s306 = sand.u32 %s185, 1
        %s307 = smul.addr %s306, 4
        %s308 = scalar_lea.vmem [#allocation7], %s307
        %v310 = vld [vmem:[%s274] sm:$0xff]
        %v311 = vpack.c.bf16 %v310, %v310
        %v312 = vld [vmem:[#allocation5] sm:$0xf]
        %v313 = vld [vmem:[#allocation5 + $0x4] sm:$0xf]
        %v314 = vld [vmem:[#allocation5 + $0x8] sm:$0xf]
        %v315 = vld [vmem:[#allocation5 + $0xc] sm:$0xf]
        %v316 = vld [vmem:[#allocation5 + $0x10] sm:$0xf]
        %v317 = vld [vmem:[#allocation5 + $0x14] sm:$0xf]
        %v318 = vld [vmem:[#allocation5 + $0x18] sm:$0xf]
        %v319 = vld [vmem:[#allocation5 + $0x1c] sm:$0xf]
        %v320 = vld [vmem:[%s2] sm:$0x1]
        %v322 = vlaneseq
        %v323 = vshrl.u32 %v322, 7
        %v324 = vsub.s32 0, %v323
        %v325 = vrot.slane %v320, %v324
        %v335 = vunpack.c.l.b16 %v312
        %v336 = vunpack.c.l.b16 %v313
        %v337 = vunpack.c.l.b16 %v314
        %v338 = vunpack.c.l.b16 %v315
        %v339 = vunpack.c.l.b16 %v316
        %v340 = vunpack.c.l.b16 %v317
        %v341 = vunpack.c.l.b16 %v318
        %v342 = vunpack.c.l.b16 %v319
        %v343 = vpack.c.b16 %v336, %v335
        %v344 = vpack.c.b16 %v338, %v337
        %v345 = vpack.c.b16 %v340, %v339
        %v346 = vpack.c.b16 %v342, %v341
        %vm351 = vcmask 523264
        %v353 = vsel %vm351, %v311, 0
        %355 = vmatprep.subr.bf16.mxu0 0
        %356 = vmatpush1.bf16.msra.mxu0 0
        %357 = vmatprep.subr.bf16.mxu0 0
        %358 = vmatpush1.bf16.msra.mxu0 0
        %359 = vmatprep.subr.bf16.mxu0 0
        %360 = vmatpush1.bf16.msra.mxu0 0
        %361 = vmatprep.subr.bf16.mxu0 0
        %362 = vmatpush1.bf16.msra.mxu0 0
        %363 = vmatprep.subr.bf16.mxu0 0
        %364 = vmatpush1.bf16.msra.mxu0 %v346
        %365 = vmatprep.subr.bf16.mxu0 0
        %366 = vmatpush1.bf16.msra.mxu0 %v345
        %367 = vmatprep.subr.bf16.mxu0 0
        %368 = vmatpush1.bf16.msra.mxu0 %v344
        %369 = vmatprep.subr.bf16.mxu0 0
        %370 = vmatpush1.bf16.msra.mxu0 %v343
        %371 = vmatprep.subr.bf16.mxu0 0
        %372 = vmatpush2.bf16.msra.mxu0 0
        %373 = vmatprep.subr.bf16.mxu0 0
        %374 = vmatpush2.bf16.msra.mxu0 0
        %375 = vmatprep.subr.bf16.mxu0 0
        %376 = vmatpush2.bf16.msra.mxu0 0
        %377 = vmatprep.subr.bf16.mxu0 0
        %378 = vmatpush2.bf16.msra.mxu0 0
        %379 = vmatprep.subr.bf16.mxu0 0
        %380 = vmatpush2.bf16.msra.mxu0 0
        %381 = vmatprep.subr.bf16.mxu0 0
        %382 = vmatpush2.bf16.msra.mxu0 0
        %383 = vmatprep.subr.bf16.mxu0 0
        %384 = vmatpush2.bf16.msra.mxu0 0
        %385 = vmatprep.subr.bf16.mxu0 0
        %386 = vmatpush2.bf16.msra.mxu0 0
        %387 = vmatprep.mubr.bf16.mxu0 0
        %388 = vmatmul.mubr.bf16.gmra.mxu0 %v353
        %v389 = vpop.f32.mrf.mxu0
        %v390 = vadd.f32 %v325, %v389
        %v391 = vpop.f32.mrf.mxu0
        %v392 = vpop.f32.mrf.mxu0
        %v393 = vpop.f32.mrf.mxu0
        %394 = vdwg.mxu0
        %v395 = vmul.f32 %v390, 0.5
        %v396 = vmul.f32 %v390, 0.70710677
        %v397 = verf.f32.pop %v396
        %v398 = vadd.f32 %v397, 1.0
        %v399 = vmul.f32 %v395, %v398
        %v400 = vsel %vm351, %v399, 0.0
        %401 = vadd.xlane.f32.xlu0 %v400
        %v402 = vpop.xlane.xlu0 %401
        %v403 = vrcp.pop 64.0
        %v404 = vmul.f32 %v402, %v403
        %v405 = vsub.f32 %v399, %v404
        %v406 = vmul.f32 %v405, %v405
        %v407 = vsel %vm351, %v406, 0.0
        %408 = vadd.xlane.f32.xlu0 %v407
        %v409 = vpop.xlane.xlu0 %408
        %v410 = vmul.f32 %v409, %v403
        %v411 = vadd.f32 %v410, 1e-05
        %v412 = vrsqrt.pop %v411
        %v413 = vmul.f32 %v405, %v412
        %v414 = vld [vmem:[%s3] sm:$0x1]
        %v416 = vlaneseq
        %v417 = vshrl.u32 %v416, 7
        %v418 = vsub.s32 0, %v417
        %v419 = vrot.slane %v414, %v418
        %v421 = vmul.f32 %v413, %v419
        %v422 = vld [vmem:[%s4] sm:$0x1]
        %v424 = vlaneseq
        %v425 = vshrl.u32 %v424, 7
        %v426 = vsub.s32 0, %v425
        %v427 = vrot.slane %v422, %v426
        %v429 = vadd.f32 %v421, %v427
        %v430 = vld [vmem:[%s5] sm:$0xff]
        %v431 = vpack.c.bf16 %v430, %v430
        %v432 = vpack.c.bf16 %v429, %v429
        %v433 = vld [vmem:[%s6] sm:$0xff]
        %435 = vset.pattern.permute.xlu0 0
        %436 = vperm.xlu0 %435, %v433
        %v437 = vpop.permute.xlu0 %436
        %vm439 = vcmask 64512
        %v441 = vsel %vm439, %v431, 0
        %vm443 = vcmask 1043456
        %v445 = vsel %vm443, %v432, 0
        %447 = vmatprep.subr.bf16.mxu0 0
        %448 = vmatpush1.bf16.msra.mxu0 0
        %449 = vmatprep.subr.bf16.mxu0 0
        %450 = vmatpush1.bf16.msra.mxu0 0
        %451 = vmatprep.subr.bf16.mxu0 0
        %452 = vmatpush1.bf16.msra.mxu0 0
        %453 = vmatprep.subr.bf16.mxu0 0
        %454 = vmatpush1.bf16.msra.mxu0 0
        %455 = vmatprep.subr.bf16.mxu0 0
        %456 = vmatpush1.bf16.msra.mxu0 0
        %457 = vmatprep.subr.bf16.mxu0 0
        %458 = vmatpush1.bf16.msra.mxu0 0
        %459 = vmatprep.subr.bf16.mxu0 0
        %460 = vmatpush1.bf16.msra.mxu0 0
        %461 = vmatprep.subr.bf16.mxu0 0
        %462 = vmatpush1.bf16.msra.mxu0 %v445
        %463 = vmatprep.subr.bf16.mxu0 0
        %464 = vmatpush2.bf16.msra.mxu0 0
        %465 = vmatprep.subr.bf16.mxu0 0
        %466 = vmatpush2.bf16.msra.mxu0 0
        %467 = vmatprep.subr.bf16.mxu0 0
        %468 = vmatpush2.bf16.msra.mxu0 0
        %469 = vmatprep.subr.bf16.mxu0 0
        %470 = vmatpush2.bf16.msra.mxu0 0
        %471 = vmatprep.subr.bf16.mxu0 0
        %472 = vmatpush2.bf16.msra.mxu0 0
        %473 = vmatprep.subr.bf16.mxu0 0
        %474 = vmatpush2.bf16.msra.mxu0 0
        %475 = vmatprep.subr.bf16.mxu0 0
        %476 = vmatpush2.bf16.msra.mxu0 0
        %477 = vmatprep.subr.bf16.mxu0 0
        %478 = vmatpush2.bf16.msra.mxu0 0
        %479 = vmatprep.mubr.bf16.mxu0 0
        %480 = vmatmul.mubr.bf16.gmra.mxu0 %v441
        %v481 = vpop.f32.mrf.mxu0
        %v482 = vadd.f32 %v437, %v481
        %v483 = vpop.f32.mrf.mxu0
        %v484 = vpop.f32.mrf.mxu0
        %v485 = vpop.f32.mrf.mxu0
        %486 = vdwg.mxu0
        %v487 = vpack.c.bf16 %v482, %v482
        %vm488 = vcmask 519168
        %489 = vst.msk [vmem:[%s308] sm:$0xf] %vm488, %v487
        %s490 = sand.u32 %s185, 1
        %s491 = scalar_lea.sflag [#allocation4], %s490
        %s492 = sand.u32 %s185, 1
        %s493 = smul.addr %s492, 4
        %s494 = scalar_lea.vmem [#allocation7], %s493
        // Predicated region
        $region57: #{tpu_custom_call.1} parent=47 // pred_check
          %p495 = pneg %p195
        $region58: #{tpu_custom_call.1} parent=47 // pred_check_branch
          %497 = sbr.rel (%p495) target = $region60
        $region59: #{tpu_custom_call.1} parent=47 // pred_region
          %s499 = ssub.s32 64, 64
          %500 = vsyncadd %s491, %s499
          %s501 = smul.addr %s25, 64
          %s502 = scalar_lea.hbm %s7, %s501
          %s504 = sshll.u32 %s494, 4
          %s505 = int_to_ptr.vmem [resolvable:$true] %s504
          %507 = dma.vmem_to_hbm [thread:$0]  %s505, 64, %s502, %s491
        $region60: #{tpu_custom_call.1} parent=47 // pred_fallthru
          _
      $region48: #{tpu_custom_call.1} parent=5 // pred_fallthru
        _
      %p508 = scmp.le.s32.totalorder 2, %s20
      // Predicated region
      $region61: #{tpu_custom_call.1} parent=5 // pred_check
        %p509 = pneg %p508
      $region62: #{tpu_custom_call.1} parent=5 // pred_check_branch
        %511 = sbr.rel (%p509) target = $region64
      $region63: #{tpu_custom_call.1} parent=5 // pred_region
        %s512 = ssub.s32 %s20, 2
        // Predicated region
        $region65: #{tpu_custom_call.1} parent=63 // pred_check
          %p513 = pneg %p201
        $region66: #{tpu_custom_call.1} parent=63 // pred_check_branch
          %515 = sbr.rel (%p513) target = $region68
        $region67: #{tpu_custom_call.1} parent=63 // pred_region
          %s516 = sand.u32 %s186, 1
          %s517 = scalar_lea.sflag [#allocation4], %s516
          %s518 = sand.u32 %s186, 1
          %s519 = smul.addr %s518, 4
          %s520 = scalar_lea.vmem [#allocation7], %s519
          %521 = dma.done %s517, 64
        $region68: #{tpu_custom_call.1} parent=63 // pred_fallthru
          _
      $region64: #{tpu_custom_call.1} parent=5 // pred_fallthru
        _
    $region6: #{tpu_custom_call.1} parent=1 // loop_footer
      %s24 = sadd.s32 1, %s20
    $region7: #{tpu_custom_call.1} parent=1 // loop_footer_branch
      %19 = sbr.rel target = $region3
    $region8: #{tpu_custom_call.1} parent=1 // loop_exit
      _
    %522 = vsyncpa [#allocation3], 1
    %s523 = scalar_lea.sflag [#allocation3], 1
    %524 = vsyncpa %s523, 1
    %525 = vsyncpa [#allocation6], 1
    %526 = vsyncpa [#allocation4], 1
    %s527 = scalar_lea.sflag [#allocation4], 1
    %528 = vsyncpa %s527, 1

</llo_original>
